<compile_context>
chip_gen: v5e
topology: v5e:2x2
jax: 0.10.0
libtpu: 0.0.40
codegen_flags: <defaults>
</compile_context>

<pallas_src>
import functools

import jax
import jax.numpy as jnp
from jax.experimental import pallas as pl
from jax.experimental.pallas import tpu as pltpu


def _round_up(x, m):
    return ((x + m - 1) // m) * m


def _residual_block_kernel(x_ref, w1_ref, w2_ref, o_ref, *, K, dil, pad, compute_dtype):
    # x_ref : (Bt, Cp, Lp)   input dtype (f32 keeps the skip path unrounded)
    # w1_ref: (Cp, K*Cp+1)   compute dtype; fused conv1 weight + bias column
    # w2_ref: (Cp, K*Cp+1)   compute dtype; fused conv2 weight + bias column
    # o_ref : (Bt, O, Lout)  compute dtype
    Bt, Cp, Lp = x_ref.shape
    O_out, L_out = o_ref.shape[1], o_ref.shape[2]

    w1 = w1_ref[...]
    w2 = w2_ref[...]

    # Hoisted per-invocation constants: causal left-pad masks (one compare+cast per
    # tap, reused by both convs and every batch element) and the folded-bias row.
    pos = jax.lax.broadcasted_iota(jnp.int32, (Cp, Lp), 1)
    masks = {}
    for k in range(K):
        s = pad - k * dil
        if s > 0:
            masks[k] = (pos >= s).astype(compute_dtype)
    ones_row = jnp.ones((1, Lp), compute_dtype)

    def im2col(sig):
        # (Cp, Lp) -> (K*Cp + 1, Lp): tap k is the causally-left-padded dilated
        # slice (right shift by s = pad - k*dil with zero fill), plus a constant-1
        # row so the bias rides the MXU contraction.
        taps = []
        for k in range(K):
            s = pad - k * dil
            if s == 0:
                t = sig
            else:
                t = pltpu.roll(sig, shift=s % Lp, axis=1)
                if s > 0:
                    # zero the left-pad region (also kills roll wrap-around there)
                    t = t * masks[k]
                # s < 0: wrapped lanes land past the valid output region (never read)
            taps.append(t)
        taps.append(ones_row)
        return jnp.concatenate(taps, axis=0)

    # Static unroll over the batch elements in this block (Bt kept small by the
    # block picker); each element is one clean 2D problem with lane width Lp.
    for b in range(Bt):
        xb = x_ref[b]                                          # (Cp, Lp)
        # conv1 (dilated, causal) + bias + ReLU — one fused MXU matmul, f32 accumulation
        h1 = jnp.maximum(
            jnp.dot(w1, im2col(xb.astype(compute_dtype)),
                    preferred_element_type=jnp.float32), 0.0)
        # TODO(synk): dropout1/dropout2 are identity in eval mode; training-mode dropout not implemented.
        # conv2 — taps built from in-register h1 (no scratch / no HBM round trip)
        h2 = jnp.maximum(
            jnp.dot(w2, im2col(h1.astype(compute_dtype)),
                    preferred_element_type=jnp.float32), 0.0)
        # residual add (downsample is None since n_inputs == n_outputs) + final ReLU;
        # the unrounded x is used for the skip path.
        y = jnp.maximum(h2 + xb.astype(jnp.float32), 0.0)
        o_ref[b] = y[:O_out, :L_out].astype(o_ref.dtype)


def _vmem_budget_bytes():
    """(per-step VMEM budget, vmem_limit_bytes) chosen from the chip generation."""
    try:
        cap = int(pltpu.get_tpu_info().vmem_capacity_bytes)
    except Exception:
        cap = 64 << 20                       # conservative default (v7x-sized)
    if cap >= (100 << 20):                   # v5e / v6e: 128 MiB physical VMEM
        return 18 << 20, 64 << 20
    return 8 << 20, 32 << 20                 # v7x-class: 64 MiB per TensorCore


def _vmem_step_bytes(bt, Cp, Lp, K, item_c, x_item, x_bufs):
    """K-aware per-grid-step VMEM estimate (conservative)."""
    x_blk = x_bufs * bt * Cp * Lp * x_item            # pipelined input block buffers
    o_blk = 2 * bt * Cp * Lp * item_c                 # pipelined output block (upper bound)
    w_blk = 2 * 2 * Cp * (K * Cp + 1) * item_c        # resident fused weights
    m_blk = (K - 1) * Cp * Lp * item_c                # hoisted causal masks
    # ~2 batch elements in flight: two (K*Cp+1, Lp) im2col slabs in compute dtype
    # plus f32 h1/h2/x per element.
    live = 2 * (2 * (K * Cp + 1) * Lp * item_c + 3 * Cp * Lp * 4)
    return x_blk + o_blk + w_blk + m_blk + live


def _pick_batch_block(B, Cp, Lp, K, item_c, x_item, budget, x_bufs, max_unroll=8):
    cands = [bt for bt in range(1, min(B, max_unroll) + 1)
             if B % bt == 0
             and _vmem_step_bytes(bt, Cp, Lp, K, item_c, x_item, x_bufs) <= budget]
    if not cands:
        # Guarded fallback: smallest legal block (never silently pick a huge block).
        # TODO(synk): for very long L even bt=1 can exceed the budget; a length-axis
        # grid split with a 2*dil*(K-1) causal halo would be needed there.
        return 1
    even = [bt for bt in cands if (B // bt) % 2 == 0]   # v7x: 2 TCs like even step counts
    multi = [bt for bt in cands if B // bt >= 2]
    pool = even or multi or cands
    return max(pool)


def residual_block_1dcnn(x, w1, b1, w2, b2, *, kernel_size, stride, dilation,
                         padding, compute_dtype=jnp.bfloat16):
    """Forward pass of ResidualBlock_1DCNN (eval mode).

    x: (B, C, L); w1: (O, C, K); b1: (O,); w2: (O, O, K); b2: (O,).
    Weights are the *effective* (already weight-normed) conv weights.
    Returns (B, O, Lout) in compute_dtype, Lout = L + 2*(padding - dilation*(K-1)).
    """
    assert stride == 1, "TCN residual block uses stride=1"
    B, C, L = x.shape
    O = w1.shape[0]
    assert C == O, "downsample-None path requires n_inputs == n_outputs"
    # TODO(synk): downsample (1x1 conv) branch for n_inputs != n_outputs not implemented.
    K, dil, pad = kernel_size, dilation, padding
    assert 1 <= pad <= dil * (K - 1) < L, "causal-chomp pattern: 1 <= pad <= dil*(K-1) < L"
    shrink = dil * (K - 1) - pad              # length lost per conv stage (0 for standard TCN)
    Lout = L - 2 * shrink
    assert Lout >= 1

    item_c = jnp.dtype(compute_dtype).itemsize
    sub = 8 * (4 // item_c)                   # sublane tile rows: 8 (f32) / 16 (bf16)
    Cp = _round_up(C, sub)                    # tile-aligned tap height for the im2col concat
    Lp = _round_up(L, 128)                    # lane-dense blocks & native-width rolls

    # Keep the skip path full precision: x stays in its own dtype and is cast to
    # compute_dtype in-kernel only for the MXU slab.
    x_f = x if x.dtype in (jnp.float32, jnp.bfloat16) else x.astype(jnp.float32)
    if Cp != C or Lp != L:
        # Single pad op; skipped entirely (zero wrapper HBM round trips) when
        # C is already a multiple of the sublane tile and L a multiple of 128.
        x_in = jnp.pad(x_f, ((0, 0), (0, Cp - C), (0, Lp - L)))
    else:
        x_in = x_f
    x_item = x_in.dtype.itemsize

    def fuse(w, b):
        # (O, Cin, K) -> (Cp, K*Cp) with zero-padded channels, plus a bias column
        # so the bias is folded into the MXU contraction.
        wp = jnp.pad(w, ((0, Cp - w.shape[0]), (0, Cp - w.shape[1]), (0, 0)))
        wf = jnp.transpose(wp, (0, 2, 1)).reshape(Cp, K * Cp)
        bp = jnp.pad(b, (0, Cp - b.shape[0]))
        return jnp.concatenate([wf, bp[:, None]], axis=1).astype(compute_dtype)

    w1_aug = fuse(w1, b1)
    w2_aug = fuse(w2, b2)

    budget, vmem_limit = _vmem_budget_bytes()
    x_bufs = 3 if Cp <= 64 else 2             # deeper input pipelining when compute is short
    Bt = _pick_batch_block(B, Cp, Lp, K, item_c, x_item, budget, x_bufs)

    kernel = functools.partial(_residual_block_kernel, K=K, dil=dil, pad=pad,
                               compute_dtype=compute_dtype)

    def _run(x_spec):
        return pl.pallas_call(
            kernel,
            out_shape=jax.ShapeDtypeStruct((B, O, Lout), compute_dtype),
            grid_spec=pltpu.PrefetchScalarGridSpec(
                num_scalar_prefetch=0,
                grid=(B // Bt,),
                in_specs=[
                    x_spec,                                            # (Bt, Cp, Lp) input block
                    pl.BlockSpec((Cp, K * Cp + 1), lambda i: (0, 0)),  # fused conv1 w+b (resident)
                    pl.BlockSpec((Cp, K * Cp + 1), lambda i: (0, 0)),  # fused conv2 w+b (resident)
                ],
                out_specs=pl.BlockSpec((Bt, O, Lout), lambda i: (i, 0, 0)),
            ),
            compiler_params=pltpu.CompilerParams(
                dimension_semantics=("parallel",),
                vmem_limit_bytes=vmem_limit),
        )(x_in, w1_aug, w2_aug)

    plain_spec = pl.BlockSpec((Bt, Cp, Lp), lambda i: (i, 0, 0))
    if x_bufs != 2 and hasattr(pl, "Buffered"):
        try:
            deep_spec = pl.BlockSpec((Bt, Cp, Lp), lambda i: (i, 0, 0),
                                     pipeline_mode=pl.Buffered(x_bufs))
            return _run(deep_spec)
        except Exception:
            # Buffered / pipeline_mode unavailable in this jax build -> default 2-deep.
            return _run(plain_spec)
    return _run(plain_spec)


# ----------------------------- test harness -----------------------------

def _weight_norm(v, g):
    # PyTorch weight_norm over dim=0: w[o] = g[o] * v[o] / ||v[o]||_2 (norm over (in, k))
    norm = jnp.sqrt(jnp.sum(v * v, axis=(1, 2), keepdims=True))
    return g[:, None, None] * v / norm


def _reference(x, w1, b1, w2, b2, *, kernel_size, dilation, padding):
    """Pure-JAX tap-sum reference (same math, no Pallas)."""
    K, dil, pad = kernel_size, dilation, padding
    B, _, L = x.shape
    Lc1 = L + pad - dil * (K - 1)
    Lc2 = Lc1 + pad - dil * (K - 1)
    xpad = jnp.pad(x, ((0, 0), (0, 0), (pad, 0)))
    h = jnp.zeros((B, w1.shape[0], Lc1), jnp.float32)
    for k in range(K):
        h = h + jnp.einsum("oc,bcl->bol", w1[:, :, k], xpad[:, :, k * dil: k * dil + Lc1])
    h = jnp.maximum(h + b1[None, :, None], 0.0)
    hpad = jnp.pad(h, ((0, 0), (0, 0), (pad, 0)))
    h2 = jnp.zeros((B, w2.shape[0], Lc2), jnp.float32)
    for k in range(K):
        h2 = h2 + jnp.einsum("oc,bcl->bol", w2[:, :, k], hpad[:, :, k * dil: k * dil + Lc2])
    h2 = jnp.maximum(h2 + b2[None, :, None], 0.0)
    return jnp.maximum(h2 + x[:, :, :Lc2], 0.0)


def _make_params(key, C, K):
    k1, k2, k3, k4, k5, k6 = jax.random.split(key, 6)
    v1 = 0.01 * jax.random.normal(k1, (C, C, K), jnp.float32)
    g1 = 1.0 + 0.1 * jax.random.uniform(k2, (C,), jnp.float32)
    w1 = _weight_norm(v1, g1)
    b1 = 0.05 * jax.random.normal(k3, (C,), jnp.float32)
    v2 = 0.01 * jax.random.normal(k4, (C, C, K), jnp.float32)
    g2 = 1.0 + 0.1 * jax.random.uniform(k5, (C,), jnp.float32)
    w2 = _weight_norm(v2, g2)
    b2 = 0.05 * jax.random.normal(k6, (C,), jnp.float32)
    return w1, b1, w2, b2


def _check_case(key, *, B, C, L, K, dil, pad):
    kp, kx = jax.random.split(key)
    w1, b1, w2, b2 = _make_params(kp, C, K)
    x = jax.random.normal(kx, (B, C, L), jnp.float32)
    ref = _reference(x, w1, b1, w2, b2, kernel_size=K, dilation=dil, padding=pad)

    # Strict check with f32 MXU inputs (validates shift / mask / padding / bias-fold logic).
    out_f32 = jax.block_until_ready(residual_block_1dcnn(
        x, w1, b1, w2, b2, kernel_size=K, stride=1, dilation=dil, padding=pad,
        compute_dtype=jnp.float32))
    assert out_f32.shape == ref.shape, (out_f32.shape, ref.shape)
    assert jnp.allclose(out_f32, ref, atol=1e-4, rtol=1e-4), "f32 mismatch vs reference"

    # Default fast path: bf16 MXU inputs + bf16 output, f32 accumulation / f32 skip path.
    out_bf16 = jax.block_until_ready(residual_block_1dcnn(
        x, w1, b1, w2, b2, kernel_size=K, stride=1, dilation=dil, padding=pad,
        compute_dtype=jnp.bfloat16))
    assert out_bf16.shape == ref.shape
    assert out_bf16.dtype == jnp.bfloat16
    assert jnp.allclose(out_bf16.astype(jnp.float32), ref, atol=3e-2, rtol=3e-2), \
        "bf16 mismatch vs reference"


if __name__ == "__main__":
    root = jax.random.PRNGKey(0)
    k1, k2 = jax.random.split(root)
    # Standard TCN config: causal padding = dilation*(K-1)  (Lout == L).
    _check_case(k1, B=8, C=8, L=32, K=3, dil=2, pad=4)
    # pad < dilation*(K-1): pins the shrink / roll-wrap-containment logic (Lout < L).
    _check_case(k2, B=4, C=8, L=32, K=3, dil=2, pad=2)
    print("KERNEL_OK")
</pallas_src>

<mosaic_0001>
module attributes {stable_mosaic.version = 11 : i64} {
  func.func @_residual_block_kernel(%arg0: i32, %arg1: memref<4x8x128xf32, #tpu.memory_space<vmem>>, %arg2: memref<8x25xf32, #tpu.memory_space<vmem>>, %arg3: memref<8x25xf32, #tpu.memory_space<vmem>>, %arg4: memref<4x8x32xf32, #tpu.memory_space<vmem>>) attributes {dimension_semantics = [#tpu.dimension_semantics<parallel>], iteration_bounds = array<i64: 2>, scalar_prefetch = 0 : i64, scratch_operands = 0 : i64, tpu.core_type = #tpu.core_type<tc>, window_params = [{transform_indices = @transform_0, window_bounds = array<i64: 4, 8, 128>}, {pipeline_mode = #tpu.pipeline_mode<synchronous>, transform_indices = @transform_1, window_bounds = array<i64: 8, 25>}, {pipeline_mode = #tpu.pipeline_mode<synchronous>, transform_indices = @transform_2, window_bounds = array<i64: 8, 25>}, {transform_indices = @transform_3, window_bounds = array<i64: 4, 8, 32>}]} {
    %c0 = arith.constant 0 : index
    %c0_0 = arith.constant 0 : index
    %0 = vector.load %arg2[%c0, %c0_0] : memref<8x25xf32, #tpu.memory_space<vmem>>, vector<8x25xf32>
    %c0_1 = arith.constant 0 : index
    %c0_2 = arith.constant 0 : index
    %1 = vector.load %arg3[%c0_1, %c0_2] : memref<8x25xf32, #tpu.memory_space<vmem>>, vector<8x25xf32>
    %2 = tpu.iota {dimensions = array<i32: 1>} : vector<8x128xi32>
    %c4_i32 = arith.constant 4 : i32
    %3 = vector.broadcast %c4_i32 : i32 to vector<8x128xi32>
    %4 = arith.cmpi sge, %2, %3 : vector<8x128xi32>
    %5 = arith.extui %4 : vector<8x128xi1> to vector<8x128xi32>
    %6 = arith.sitofp %5 : vector<8x128xi32> to vector<8x128xf32>
    %c2_i32 = arith.constant 2 : i32
    %7 = vector.broadcast %c2_i32 : i32 to vector<8x128xi32>
    %8 = arith.cmpi sge, %2, %7 : vector<8x128xi32>
    %9 = arith.extui %8 : vector<8x128xi1> to vector<8x128xi32>
    %10 = arith.sitofp %9 : vector<8x128xi32> to vector<8x128xf32>
    %cst = arith.constant 1.000000e+00 : f32
    %11 = vector.broadcast %cst : f32 to vector<1x128xf32>
    %c0_3 = arith.constant 0 : index
    %c0_4 = arith.constant 0 : index
    %c0_5 = arith.constant 0 : index
    %12 = vector.load %arg1[%c0_3, %c0_4, %c0_5] : memref<4x8x128xf32, #tpu.memory_space<vmem>>, vector<1x8x128xf32>
    %13 = vector.shape_cast %12 : vector<1x8x128xf32> to vector<8x128xf32>
    %c4_i32_6 = arith.constant 4 : i32
    %14 = tpu.dynamic_rotate %13 by %c4_i32_6 dim 1 : vector<8x128xf32>, i32 -> vector<8x128xf32>
    %15 = arith.mulf %14, %6 : vector<8x128xf32>
    %c2_i32_7 = arith.constant 2 : i32
    %16 = tpu.dynamic_rotate %13 by %c2_i32_7 dim 1 : vector<8x128xf32>, i32 -> vector<8x128xf32>
    %17 = arith.mulf %16, %10 : vector<8x128xf32>
    %18 = tpu.concatenate %15, %17, %13, %11 in 0 : vector<8x128xf32>, vector<8x128xf32>, vector<8x128xf32>, vector<1x128xf32> -> vector<25x128xf32>
    %cst_8 = arith.constant dense<0.000000e+00> : vector<8x128xf32>
    %19 = tpu.matmul %0, %18, %cst_8 {dimension_numbers = #tpu.dot_dimension_numbers<[1], [0], [0], [1], [0, 0, 1, 1], [], []>} : vector<8x25xf32>, vector<25x128xf32>, vector<8x128xf32> -> vector<8x128xf32>
    %cst_9 = arith.constant 0.000000e+00 : f32
    %20 = vector.broadcast %cst_9 : f32 to vector<8x128xf32>
    %21 = arith.maximumf %19, %20 : vector<8x128xf32>
    %c4_i32_10 = arith.constant 4 : i32
    %22 = tpu.dynamic_rotate %21 by %c4_i32_10 dim 1 : vector<8x128xf32>, i32 -> vector<8x128xf32>
    %23 = arith.mulf %22, %6 : vector<8x128xf32>
    %c2_i32_11 = arith.constant 2 : i32
    %24 = tpu.dynamic_rotate %21 by %c2_i32_11 dim 1 : vector<8x128xf32>, i32 -> vector<8x128xf32>
    %25 = arith.mulf %24, %10 : vector<8x128xf32>
    %26 = tpu.concatenate %23, %25, %21, %11 in 0 : vector<8x128xf32>, vector<8x128xf32>, vector<8x128xf32>, vector<1x128xf32> -> vector<25x128xf32>
    %cst_12 = arith.constant dense<0.000000e+00> : vector<8x128xf32>
    %27 = tpu.matmul %1, %26, %cst_12 {dimension_numbers = #tpu.dot_dimension_numbers<[1], [0], [0], [1], [0, 0, 1, 1], [], []>} : vector<8x25xf32>, vector<25x128xf32>, vector<8x128xf32> -> vector<8x128xf32>
    %cst_13 = arith.constant 0.000000e+00 : f32
    %28 = vector.broadcast %cst_13 : f32 to vector<8x128xf32>
    %29 = arith.maximumf %27, %28 : vector<8x128xf32>
    %30 = arith.addf %29, %13 : vector<8x128xf32>
    %cst_14 = arith.constant 0.000000e+00 : f32
    %31 = vector.broadcast %cst_14 : f32 to vector<8x128xf32>
    %32 = arith.maximumf %30, %31 : vector<8x128xf32>
    %33 = vector.extract_strided_slice %32 {offsets = [0, 0], sizes = [8, 32], strides = [1, 1]} : vector<8x128xf32> to vector<8x32xf32>
    %c0_15 = arith.constant 0 : index
    %c0_16 = arith.constant 0 : index
    %c0_17 = arith.constant 0 : index
    %34 = vector.load %arg4[%c0_15, %c0_16, %c0_17] : memref<4x8x32xf32, #tpu.memory_space<vmem>>, vector<1x8x32xf32>
    %35 = vector.shape_cast %34 : vector<1x8x32xf32> to vector<8x32xf32>
    %36 = vector.shape_cast %33 : vector<8x32xf32> to vector<1x8x32xf32>
    tpu.vector_store %arg4[%c0_15, %c0_16, %c0_17], %36 {strides = array<i32>} : memref<4x8x32xf32, #tpu.memory_space<vmem>>, vector<1x8x32xf32>,
    %c1 = arith.constant 1 : index
    %c0_18 = arith.constant 0 : index
    %c0_19 = arith.constant 0 : index
    %37 = vector.load %arg1[%c1, %c0_18, %c0_19] : memref<4x8x128xf32, #tpu.memory_space<vmem>>, vector<1x8x128xf32>
    %38 = vector.shape_cast %37 : vector<1x8x128xf32> to vector<8x128xf32>
    %c4_i32_20 = arith.constant 4 : i32
    %39 = tpu.dynamic_rotate %38 by %c4_i32_20 dim 1 : vector<8x128xf32>, i32 -> vector<8x128xf32>
    %40 = arith.mulf %39, %6 : vector<8x128xf32>
    %c2_i32_21 = arith.constant 2 : i32
    %41 = tpu.dynamic_rotate %38 by %c2_i32_21 dim 1 : vector<8x128xf32>, i32 -> vector<8x128xf32>
    %42 = arith.mulf %41, %10 : vector<8x128xf32>
    %43 = tpu.concatenate %40, %42, %38, %11 in 0 : vector<8x128xf32>, vector<8x128xf32>, vector<8x128xf32>, vector<1x128xf32> -> vector<25x128xf32>
    %cst_22 = arith.constant dense<0.000000e+00> : vector<8x128xf32>
    %44 = tpu.matmul %0, %43, %cst_22 {dimension_numbers = #tpu.dot_dimension_numbers<[1], [0], [0], [1], [0, 0, 1, 1], [], []>} : vector<8x25xf32>, vector<25x128xf32>, vector<8x128xf32> -> vector<8x128xf32>
    %cst_23 = arith.constant 0.000000e+00 : f32
    %45 = vector.broadcast %cst_23 : f32 to vector<8x128xf32>
    %46 = arith.maximumf %44, %45 : vector<8x128xf32>
    %c4_i32_24 = arith.constant 4 : i32
    %47 = tpu.dynamic_rotate %46 by %c4_i32_24 dim 1 : vector<8x128xf32>, i32 -> vector<8x128xf32>
    %48 = arith.mulf %47, %6 : vector<8x128xf32>
    %c2_i32_25 = arith.constant 2 : i32
    %49 = tpu.dynamic_rotate %46 by %c2_i32_25 dim 1 : vector<8x128xf32>, i32 -> vector<8x128xf32>
    %50 = arith.mulf %49, %10 : vector<8x128xf32>
    %51 = tpu.concatenate %48, %50, %46, %11 in 0 : vector<8x128xf32>, vector<8x128xf32>, vector<8x128xf32>, vector<1x128xf32> -> vector<25x128xf32>
    %cst_26 = arith.constant dense<0.000000e+00> : vector<8x128xf32>
    %52 = tpu.matmul %1, %51, %cst_26 {dimension_numbers = #tpu.dot_dimension_numbers<[1], [0], [0], [1], [0, 0, 1, 1], [], []>} : vector<8x25xf32>, vector<25x128xf32>, vector<8x128xf32> -> vector<8x128xf32>
    %cst_27 = arith.constant 0.000000e+00 : f32
    %53 = vector.broadcast %cst_27 : f32 to vector<8x128xf32>
    %54 = arith.maximumf %52, %53 : vector<8x128xf32>
    %55 = arith.addf %54, %38 : vector<8x128xf32>
    %cst_28 = arith.constant 0.000000e+00 : f32
    %56 = vector.broadcast %cst_28 : f32 to vector<8x128xf32>
    %57 = arith.maximumf %55, %56 : vector<8x128xf32>
    %58 = vector.extract_strided_slice %57 {offsets = [0, 0], sizes = [8, 32], strides = [1, 1]} : vector<8x128xf32> to vector<8x32xf32>
    %c1_29 = arith.constant 1 : index
    %c0_30 = arith.constant 0 : index
    %c0_31 = arith.constant 0 : index
    %59 = vector.load %arg4[%c1_29, %c0_30, %c0_31] : memref<4x8x32xf32, #tpu.memory_space<vmem>>, vector<1x8x32xf32>
    %60 = vector.shape_cast %59 : vector<1x8x32xf32> to vector<8x32xf32>
    %61 = vector.shape_cast %58 : vector<8x32xf32> to vector<1x8x32xf32>
    tpu.vector_store %arg4[%c1_29, %c0_30, %c0_31], %61 {strides = array<i32>} : memref<4x8x32xf32, #tpu.memory_space<vmem>>, vector<1x8x32xf32>,
    %c2 = arith.constant 2 : index
    %c0_32 = arith.constant 0 : index
    %c0_33 = arith.constant 0 : index
    %62 = vector.load %arg1[%c2, %c0_32, %c0_33] : memref<4x8x128xf32, #tpu.memory_space<vmem>>, vector<1x8x128xf32>
    %63 = vector.shape_cast %62 : vector<1x8x128xf32> to vector<8x128xf32>
    %c4_i32_34 = arith.constant 4 : i32
    %64 = tpu.dynamic_rotate %63 by %c4_i32_34 dim 1 : vector<8x128xf32>, i32 -> vector<8x128xf32>
    %65 = arith.mulf %64, %6 : vector<8x128xf32>
    %c2_i32_35 = arith.constant 2 : i32
    %66 = tpu.dynamic_rotate %63 by %c2_i32_35 dim 1 : vector<8x128xf32>, i32 -> vector<8x128xf32>
    %67 = arith.mulf %66, %10 : vector<8x128xf32>
    %68 = tpu.concatenate %65, %67, %63, %11 in 0 : vector<8x128xf32>, vector<8x128xf32>, vector<8x128xf32>, vector<1x128xf32> -> vector<25x128xf32>
    %cst_36 = arith.constant dense<0.000000e+00> : vector<8x128xf32>
    %69 = tpu.matmul %0, %68, %cst_36 {dimension_numbers = #tpu.dot_dimension_numbers<[1], [0], [0], [1], [0, 0, 1, 1], [], []>} : vector<8x25xf32>, vector<25x128xf32>, vector<8x128xf32> -> vector<8x128xf32>
    %cst_37 = arith.constant 0.000000e+00 : f32
    %70 = vector.broadcast %cst_37 : f32 to vector<8x128xf32>
    %71 = arith.maximumf %69, %70 : vector<8x128xf32>
    %c4_i32_38 = arith.constant 4 : i32
    %72 = tpu.dynamic_rotate %71 by %c4_i32_38 dim 1 : vector<8x128xf32>, i32 -> vector<8x128xf32>
    %73 = arith.mulf %72, %6 : vector<8x128xf32>
    %c2_i32_39 = arith.constant 2 : i32
    %74 = tpu.dynamic_rotate %71 by %c2_i32_39 dim 1 : vector<8x128xf32>, i32 -> vector<8x128xf32>
    %75 = arith.mulf %74, %10 : vector<8x128xf32>
    %76 = tpu.concatenate %73, %75, %71, %11 in 0 : vector<8x128xf32>, vector<8x128xf32>, vector<8x128xf32>, vector<1x128xf32> -> vector<25x128xf32>
    %cst_40 = arith.constant dense<0.000000e+00> : vector<8x128xf32>
    %77 = tpu.matmul %1, %76, %cst_40 {dimension_numbers = #tpu.dot_dimension_numbers<[1], [0], [0], [1], [0, 0, 1, 1], [], []>} : vector<8x25xf32>, vector<25x128xf32>, vector<8x128xf32> -> vector<8x128xf32>
    %cst_41 = arith.constant 0.000000e+00 : f32
    %78 = vector.broadcast %cst_41 : f32 to vector<8x128xf32>
    %79 = arith.maximumf %77, %78 : vector<8x128xf32>
    %80 = arith.addf %79, %63 : vector<8x128xf32>
    %cst_42 = arith.constant 0.000000e+00 : f32
    %81 = vector.broadcast %cst_42 : f32 to vector<8x128xf32>
    %82 = arith.maximumf %80, %81 : vector<8x128xf32>
    %83 = vector.extract_strided_slice %82 {offsets = [0, 0], sizes = [8, 32], strides = [1, 1]} : vector<8x128xf32> to vector<8x32xf32>
    %c2_43 = arith.constant 2 : index
    %c0_44 = arith.constant 0 : index
    %c0_45 = arith.constant 0 : index
    %84 = vector.load %arg4[%c2_43, %c0_44, %c0_45] : memref<4x8x32xf32, #tpu.memory_space<vmem>>, vector<1x8x32xf32>
    %85 = vector.shape_cast %84 : vector<1x8x32xf32> to vector<8x32xf32>
    %86 = vector.shape_cast %83 : vector<8x32xf32> to vector<1x8x32xf32>
    tpu.vector_store %arg4[%c2_43, %c0_44, %c0_45], %86 {strides = array<i32>} : memref<4x8x32xf32, #tpu.memory_space<vmem>>, vector<1x8x32xf32>,
    %c3 = arith.constant 3 : index
    %c0_46 = arith.constant 0 : index
    %c0_47 = arith.constant 0 : index
    %87 = vector.load %arg1[%c3, %c0_46, %c0_47] : memref<4x8x128xf32, #tpu.memory_space<vmem>>, vector<1x8x128xf32>
    %88 = vector.shape_cast %87 : vector<1x8x128xf32> to vector<8x128xf32>
    %c4_i32_48 = arith.constant 4 : i32
    %89 = tpu.dynamic_rotate %88 by %c4_i32_48 dim 1 : vector<8x128xf32>, i32 -> vector<8x128xf32>
    %90 = arith.mulf %89, %6 : vector<8x128xf32>
    %c2_i32_49 = arith.constant 2 : i32
    %91 = tpu.dynamic_rotate %88 by %c2_i32_49 dim 1 : vector<8x128xf32>, i32 -> vector<8x128xf32>
    %92 = arith.mulf %91, %10 : vector<8x128xf32>
    %93 = tpu.concatenate %90, %92, %88, %11 in 0 : vector<8x128xf32>, vector<8x128xf32>, vector<8x128xf32>, vector<1x128xf32> -> vector<25x128xf32>
    %cst_50 = arith.constant dense<0.000000e+00> : vector<8x128xf32>
    %94 = tpu.matmul %0, %93, %cst_50 {dimension_numbers = #tpu.dot_dimension_numbers<[1], [0], [0], [1], [0, 0, 1, 1], [], []>} : vector<8x25xf32>, vector<25x128xf32>, vector<8x128xf32> -> vector<8x128xf32>
    %cst_51 = arith.constant 0.000000e+00 : f32
    %95 = vector.broadcast %cst_51 : f32 to vector<8x128xf32>
    %96 = arith.maximumf %94, %95 : vector<8x128xf32>
    %c4_i32_52 = arith.constant 4 : i32
    %97 = tpu.dynamic_rotate %96 by %c4_i32_52 dim 1 : vector<8x128xf32>, i32 -> vector<8x128xf32>
    %98 = arith.mulf %97, %6 : vector<8x128xf32>
    %c2_i32_53 = arith.constant 2 : i32
    %99 = tpu.dynamic_rotate %96 by %c2_i32_53 dim 1 : vector<8x128xf32>, i32 -> vector<8x128xf32>
    %100 = arith.mulf %99, %10 : vector<8x128xf32>
    %101 = tpu.concatenate %98, %100, %96, %11 in 0 : vector<8x128xf32>, vector<8x128xf32>, vector<8x128xf32>, vector<1x128xf32> -> vector<25x128xf32>
    %cst_54 = arith.constant dense<0.000000e+00> : vector<8x128xf32>
    %102 = tpu.matmul %1, %101, %cst_54 {dimension_numbers = #tpu.dot_dimension_numbers<[1], [0], [0], [1], [0, 0, 1, 1], [], []>} : vector<8x25xf32>, vector<25x128xf32>, vector<8x128xf32> -> vector<8x128xf32>
    %cst_55 = arith.constant 0.000000e+00 : f32
    %103 = vector.broadcast %cst_55 : f32 to vector<8x128xf32>
    %104 = arith.maximumf %102, %103 : vector<8x128xf32>
    %105 = arith.addf %104, %88 : vector<8x128xf32>
    %cst_56 = arith.constant 0.000000e+00 : f32
    %106 = vector.broadcast %cst_56 : f32 to vector<8x128xf32>
    %107 = arith.maximumf %105, %106 : vector<8x128xf32>
    %108 = vector.extract_strided_slice %107 {offsets = [0, 0], sizes = [8, 32], strides = [1, 1]} : vector<8x128xf32> to vector<8x32xf32>
    %c3_57 = arith.constant 3 : index
    %c0_58 = arith.constant 0 : index
    %c0_59 = arith.constant 0 : index
    %109 = vector.load %arg4[%c3_57, %c0_58, %c0_59] : memref<4x8x32xf32, #tpu.memory_space<vmem>>, vector<1x8x32xf32>
    %110 = vector.shape_cast %109 : vector<1x8x32xf32> to vector<8x32xf32>
    %111 = vector.shape_cast %108 : vector<8x32xf32> to vector<1x8x32xf32>
    tpu.vector_store %arg4[%c3_57, %c0_58, %c0_59], %111 {strides = array<i32>} : memref<4x8x32xf32, #tpu.memory_space<vmem>>, vector<1x8x32xf32>,
    return
  }
  func.func @transform_0(%arg0: i32) -> (i32, i32, i32) {
    %c0_i32 = arith.constant 0 : i32
    %c0_i32_0 = arith.constant 0 : i32
    %c0_i32_1 = arith.constant 0 : i32
    return %arg0, %c0_i32, %c0_i32_0 : i32, i32, i32
  }
  func.func @transform_1(%arg0: i32) -> (i32, i32) {
    %c0_i32 = arith.constant 0 : i32
    %c0_i32_0 = arith.constant 0 : i32
    %c0_i32_1 = arith.constant 0 : i32
    return %c0_i32, %c0_i32_0 : i32, i32
  }
  func.func @transform_2(%arg0: i32) -> (i32, i32) {
    %c0_i32 = arith.constant 0 : i32
    %c0_i32_0 = arith.constant 0 : i32
    %c0_i32_1 = arith.constant 0 : i32
    return %c0_i32, %c0_i32_0 : i32, i32
  }
  func.func @transform_3(%arg0: i32) -> (i32, i32, i32) {
    %c0_i32 = arith.constant 0 : i32
    %c0_i32_0 = arith.constant 0 : i32
    %c0_i32_1 = arith.constant 0 : i32
    return %arg0, %c0_i32, %c0_i32_0 : i32, i32, i32
  }
}

</mosaic_0001>

<llo_original>
// kernel: tpu_custom_call.1
$region0: #{tpu_custom_call.1}
  #allocation0 [shape = 'u32[]', space=smem, size = 0x4, offset = 0x4, fixed_abs, tag = 'smem constant byte address 0x4 - core index']
  #allocation1 [shape = 'u32[72,128]{1,0:T(1,128)}', space=vmem, size = 0x9000, scoped, tag = 'internal scratch']
  %s0 = inlined_call_operand.hbm [shape: f32[8,8,128], index: 0, kind: input, shape index: {}]
  %s1 = inlined_call_operand.hbm [shape: f32[8,25], index: 1, kind: input, shape index: {}]
  %s2 = inlined_call_operand.hbm [shape: f32[8,25], index: 2, kind: input, shape index: {}]
  %s3 = inlined_call_operand.hbm [shape: f32[8,8,32], index: 3, kind: output, shape index: {}]
  %s4 = sld [smem:[#allocation0]]
  $region57: #{tpu_custom_call.1} parent=0
    _
  %s6 = ssub.s32 1, %s4
  %s7 = scalar_select 0, %s6, %s4
  $region1: #{tpu_custom_call.1} parent=0
    #allocation2 [shape = 'u8[32768]{0}', space=vmem, size = 0x8000, scoped, tag = 'input window, operand 0']
    #allocation3 [shape = 's32[2]{0}', space=sflag, size = 0x8, scoped, tag = 'scoped memory for tpu_custom_call.1']
    #allocation4 [shape = 's32[2]{0}', space=sflag, size = 0x8, scoped, tag = 'scoped memory for tpu_custom_call.1']
    #allocation5 [shape = 'u8[4096]{0}', space=vmem, size = 0x1000, scoped, tag = 'input window, operand 1, single buffered']
    #allocation6 [shape = 's32[1]{0}', space=sflag, size = 0x4, scoped, tag = 'scoped memory for tpu_custom_call.1']
    #allocation7 [shape = 'u8[4096]{0}', space=vmem, size = 0x1000, scoped, tag = 'input window, operand 2, single buffered']
    #allocation8 [shape = 'u8[32768]{0}', space=vmem, size = 0x8000, scoped, tag = 'output window, operand 0']
    %8 = vsyncpa [#allocation3], 0
    %s9 = scalar_lea.sflag [#allocation3], 1
    %10 = vsyncpa %s9, 0
    %11 = vsyncpa [#allocation6], 0
    %12 = vsyncpa [#allocation4], 0
    %s13 = scalar_lea.sflag [#allocation4], 1
    %14 = vsyncpa %s13, 0
    loop: start=0, step=1, limit=4
    $region2: #{tpu_custom_call.1} parent=1 // loop_pre_header
      _
    $region3: #{tpu_custom_call.1} parent=1 // loop_header
      %s16 = sphi 0, %s20
      %p17 = scmp.ge.s32.totalorder %s16, 4
      %s26 = sphi 0, %s28
      %s29 = sphi 0, %s26
      %s30 = sphi 0, %s29
      %s46 = sphi 0, %s30
      %s50 = sphi 0, %s50
      %s52 = sphi 0, %s50
      %s53 = sphi 0, %s52
      %s67 = sphi 0, %s53
      %s71 = sphi 0, %s71
      %s73 = sphi 0, %s71
      %s74 = sphi 0, %s73
      %s88 = sphi 0, %s74
      %s94 = sphi 0, %s96
      %s97 = sphi 0, %s94
      %s98 = sphi 0, %s97
      %s114 = sphi 0, %s98
    $region4: #{tpu_custom_call.1} parent=1 // loop_header_branch
      %19 = sbr.rel (%p17) target = $region8
    $region5: #{tpu_custom_call.1} parent=1 // loop_body
      %s21 = ssub.s32 %s16, 1
      %s22 = ssub.s32 %s16, 2
      %s23 = sadd.s32 %s16, 1
      %s24 = ssub.s32 %s16, %s23
      %p25 = scmp.eq.s32.totalorder %s24, 0
      %s27 = sadd.s32 %s26, 1
      %s28 = scalar_select %p25, %s26, %s27
      %p31 = pneg %p25
      %p32 = scmp.eq.s32.totalorder %s16, 1
      %p33 = por %p31, %p32
      %p34 = scmp.ne.s32.totalorder %s26, %s29
      %p35 = scmp.eq.s32.totalorder %s16, 0
      %p36 = por %p34, %p35
      %p37 = scmp.ne.s32.totalorder %s26, %s29
      %p38 = scmp.eq.s32.totalorder %s21, 1
      %p39 = por %p37, %p38
      %p40 = scmp.ne.s32.totalorder %s29, %s30
      %p41 = scmp.eq.s32.totalorder %s21, 0
      %p42 = por %p40, %p41
      %p43 = scmp.ne.s32.totalorder %s29, %s30
      %p44 = scmp.eq.s32.totalorder %s22, 1
      %p45 = por %p43, %p44
      %p47 = scmp.ne.s32.totalorder %s30, %s46
      %p48 = scmp.eq.s32.totalorder %s22, 0
      %p49 = por %p47, %p48
      %s51 = sadd.s32 %s50, 1
      %p54 = scmp.eq.s32.totalorder %s16, 1
      %p55 = scmp.ne.s32.totalorder %s50, %s52
      %p56 = scmp.eq.s32.totalorder %s16, 0
      %p57 = por %p55, %p56
      %p58 = scmp.ne.s32.totalorder %s50, %s52
      %p59 = scmp.eq.s32.totalorder %s21, 1
      %p60 = por %p58, %p59
      %p61 = scmp.ne.s32.totalorder %s52, %s53
      %p62 = scmp.eq.s32.totalorder %s21, 0
      %p63 = por %p61, %p62
      %p64 = scmp.ne.s32.totalorder %s52, %s53
      %p65 = scmp.eq.s32.totalorder %s22, 1
      %p66 = por %p64, %p65
      %p68 = scmp.ne.s32.totalorder %s53, %s67
      %p69 = scmp.eq.s32.totalorder %s22, 0
      %p70 = por %p68, %p69
      %s72 = sadd.s32 %s71, 1
      %p75 = scmp.eq.s32.totalorder %s16, 1
      %p76 = scmp.ne.s32.totalorder %s71, %s73
      %p77 = scmp.eq.s32.totalorder %s16, 0
      %p78 = por %p76, %p77
      %p79 = scmp.ne.s32.totalorder %s71, %s73
      %p80 = scmp.eq.s32.totalorder %s21, 1
      %p81 = por %p79, %p80
      %p82 = scmp.ne.s32.totalorder %s73, %s74
      %p83 = scmp.eq.s32.totalorder %s21, 0
      %p84 = por %p82, %p83
      %p85 = scmp.ne.s32.totalorder %s73, %s74
      %p86 = scmp.eq.s32.totalorder %s22, 1
      %p87 = por %p85, %p86
      %p89 = scmp.ne.s32.totalorder %s74, %s88
      %p90 = scmp.eq.s32.totalorder %s22, 0
      %p91 = por %p89, %p90
      %s92 = ssub.s32 %s16, %s23
      %p93 = scmp.eq.s32.totalorder %s92, 0
      %s95 = sadd.s32 %s94, 1
      %s96 = scalar_select %p93, %s94, %s95
      %p99 = pneg %p93
      %p100 = scmp.eq.s32.totalorder %s16, 1
      %p101 = por %p99, %p100
      %p102 = scmp.ne.s32.totalorder %s94, %s97
      %p103 = scmp.eq.s32.totalorder %s16, 0
      %p104 = por %p102, %p103
      %p105 = scmp.ne.s32.totalorder %s94, %s97
      %p106 = scmp.eq.s32.totalorder %s21, 1
      %p107 = por %p105, %p106
      %p108 = scmp.ne.s32.totalorder %s97, %s98
      %p109 = scmp.eq.s32.totalorder %s21, 0
      %p110 = por %p108, %p109
      %p111 = scmp.ne.s32.totalorder %s97, %s98
      %p112 = scmp.eq.s32.totalorder %s22, 1
      %p113 = por %p111, %p112
      %p115 = scmp.ne.s32.totalorder %s98, %s114
      %p116 = scmp.eq.s32.totalorder %s22, 0
      %p117 = por %p115, %p116
      %p118 = scmp.le.s32.totalorder 1, %s16
      %p119 = scmp.lt.s32.totalorder %s16, 3
      %p120 = pnand %p118, %p119
      %p121 = pneg %p120
      // Predicated region
      $region9: #{tpu_custom_call.1} parent=5 // pred_check
        _
      $region10: #{tpu_custom_call.1} parent=5 // pred_check_branch
        %123 = sbr.rel (%p120) target = $region12
      $region11: #{tpu_custom_call.1} parent=5 // pred_region
        %s124 = ssub.s32 %s16, 1
        // Predicated region
        $region13: #{tpu_custom_call.1} parent=11 // pred_check
          %p125 = pneg %p63
        $region14: #{tpu_custom_call.1} parent=11 // pred_check_branch
          %127 = sbr.rel (%p125) target = $region16
        $region15: #{tpu_custom_call.1} parent=11 // pred_region
          %129 = vsyncadd [#allocation6], 0
          %s131 = sshll.u32 %s1, 4
          %s132 = int_to_ptr.hbm [resolvable:$true] %s131
          %s133 = sshll.u32 [#allocation5], 4
          %s134 = int_to_ptr.vmem [resolvable:$true] %s133
          %136 = dma.hbm_to_vmem [thread:$0]  %s132, 128, %s134, [#allocation6]
        $region16: #{tpu_custom_call.1} parent=11 // pred_fallthru
          _
        // Predicated region
        $region17: #{tpu_custom_call.1} parent=11 // pred_check
          %p137 = pneg %p84
        $region18: #{tpu_custom_call.1} parent=11 // pred_check_branch
          %139 = sbr.rel (%p137) target = $region20
        $region19: #{tpu_custom_call.1} parent=11 // pred_region
          %141 = vsyncadd [#allocation6], 0
          %s143 = sshll.u32 %s2, 4
          %s144 = int_to_ptr.hbm [resolvable:$true] %s143
          %s145 = sshll.u32 [#allocation7], 4
          %s146 = int_to_ptr.vmem [resolvable:$true] %s145
          %148 = dma.hbm_to_vmem [thread:$0]  %s144, 128, %s146, [#allocation6]
        $region20: #{tpu_custom_call.1} parent=11 // pred_fallthru
          _
      $region12: #{tpu_custom_call.1} parent=5 // pred_fallthru
        _
      %p149 = scmp.lt.s32.totalorder %s16, 2
      // Predicated region
      $region21: #{tpu_custom_call.1} parent=5 // pred_check
        %p150 = pneg %p149
      $region22: #{tpu_custom_call.1} parent=5 // pred_check_branch
        %152 = sbr.rel (%p150) target = $region24
      $region23: #{tpu_custom_call.1} parent=5 // pred_region
        // Predicated region
        $region25: #{tpu_custom_call.1} parent=23 // pred_check
          %p153 = pneg %p36
        $region26: #{tpu_custom_call.1} parent=23 // pred_check_branch
          %155 = sbr.rel (%p153) target = $region28
        $region27: #{tpu_custom_call.1} parent=23 // pred_region
          %s156 = sand.u32 %s26, 1
          %s157 = scalar_lea.sflag [#allocation3], %s156
          %s158 = sand.u32 %s26, 1
          %s159 = smul.addr %s158, 32
          %s160 = scalar_lea.vmem [#allocation2], %s159
          %s161 = smul.u32 4, %s16
          %163 = vsyncadd %s157, 0
          %s164 = smul.addr %s161, 8
          %s165 = scalar_lea.hbm %s0, %s164
          %s166 = sshll.u32 %s165, 4
          %s167 = int_to_ptr.hbm [resolvable:$true] %s166
          %s168 = sshll.u32 %s160, 4
          %s169 = int_to_ptr.vmem [resolvable:$true] %s168
          %174 = dma.hbm_to_vmem [thread:$0]  %s167, 512, %s169, %s157, 128, 128, 8
        $region28: #{tpu_custom_call.1} parent=23 // pred_fallthru
          _
      $region24: #{tpu_custom_call.1} parent=5 // pred_fallthru
        _
      %p175 = scmp.le.s32.totalorder 1, %s16
      %p176 = scmp.lt.s32.totalorder %s16, 3
      %p177 = pnand %p175, %p176
      %p178 = pneg %p177
      // Predicated region
      $region29: #{tpu_custom_call.1} parent=5 // pred_check
        _
      $region30: #{tpu_custom_call.1} parent=5 // pred_check_branch
        %180 = sbr.rel (%p177) target = $region32
      $region31: #{tpu_custom_call.1} parent=5 // pred_region
        %s181 = ssub.s32 %s16, 1
        %s182 = sand.u32 %s29, 1
        %s183 = scalar_lea.sflag [#allocation3], %s182
        %s184 = sand.u32 %s29, 1
        %s185 = smul.addr %s184, 32
        %s186 = scalar_lea.vmem [#allocation2], %s185
        // Predicated region
        $region33: #{tpu_custom_call.1} parent=31 // pred_check
          %p187 = pneg %p42
        $region34: #{tpu_custom_call.1} parent=31 // pred_check_branch
          %189 = sbr.rel (%p187) target = $region36
        $region35: #{tpu_custom_call.1} parent=31 // pred_region
          %191 = dma.done %s183, 512
        $region36: #{tpu_custom_call.1} parent=31 // pred_fallthru
          _
        // Predicated region
        $region37: #{tpu_custom_call.1} parent=31 // pred_check
          %p192 = pneg %p63
        $region38: #{tpu_custom_call.1} parent=31 // pred_check_branch
          %194 = sbr.rel (%p192) target = $region40
        $region39: #{tpu_custom_call.1} parent=31 // pred_region
          %196 = dma.done [#allocation6], 128
        $region40: #{tpu_custom_call.1} parent=31 // pred_fallthru
          _
        // Predicated region
        $region41: #{tpu_custom_call.1} parent=31 // pred_check
          %p197 = pneg %p84
        $region42: #{tpu_custom_call.1} parent=31 // pred_check_branch
          %199 = sbr.rel (%p197) target = $region44
        $region43: #{tpu_custom_call.1} parent=31 // pred_region
          %201 = dma.done [#allocation6], 128
        $region44: #{tpu_custom_call.1} parent=31 // pred_fallthru
          _
        %s202 = sand.u32 %s29, 1
        %s203 = scalar_lea.sflag [#allocation3], %s202
        %s204 = sand.u32 %s29, 1
        %s205 = smul.addr %s204, 32
        %s206 = scalar_lea.vmem [#allocation2], %s205
        %p207 = pneg %p42
        %p208 = pneg %p39
        %p209 = pneg %p63
        %p210 = pneg %p60
        %p211 = pneg %p84
        %p212 = pneg %p81
        %p213 = pneg %p110
        %p214 = pneg %p107
        %s215 = sand.u32 %s97, 1
        %s216 = scalar_lea.sflag [#allocation4], %s215
        %s217 = sand.u32 %s97, 1
        %s218 = smul.addr %s217, 32
        %s219 = scalar_lea.vmem [#allocation8], %s218
        %s220 = smul.u32 4, %s21
        %s221 = smul.u32 4, %s21
        %v222 = vld [vmem:[#allocation5] sm:$0xff]
        %v223 = vld [vmem:[#allocation7] sm:$0xff]
        %v224 = vlaneseq
        %v225 = vand.u32 %v224, 127
        %vm226 = vcmp.ge.s32.totalorder %v225, 4
        %v227 = vsel %vm226, 1, 0
        %v228 = vcvt.s32.f32 %v227
        %vm229 = vcmp.ge.s32.totalorder %v225, 2
        %v230 = vsel %vm229, 1, 0
        %v231 = vcvt.s32.f32 %v230
        %v232 = vld [vmem:[%s186] sm:$0xff]
        %233 = vrot.lane.b32.xlu0 %v232, 4
        %v234 = vpop.permute.xlu0 %233
        %v235 = vmul.f32 %v234, %v228
        %236 = vrot.lane.b32.xlu0 %v232, 2
        %v237 = vpop.permute.xlu0 %236
        %v238 = vmul.f32 %v237, %v231
        %vm239 = vcmask 203776
        %v241 = vsel %vm239, %v222, 0
        %vm243 = vcmask 1040384
        %v245 = vsel %vm243, 1.0, 0
        %247 = vmatpush.msra.mxu0 0.0
        %248 = vmatpush.msra.mxu0 0.0
        %249 = vmatpush.msra.mxu0 0.0
        %250 = vmatpush.msra.mxu0 0.0
        %251 = vmatpush.msra.mxu0 0.0
        %252 = vmatpush.msra.mxu0 0.0
        %253 = vmatpush.msra.mxu0 0.0
        %254 = vmatpush.msra.mxu0 0.0
        %255 = vmatpush.msra.mxu0 0.0
        %256 = vmatpush.msra.mxu0 0.0
        %257 = vmatpush.msra.mxu0 0.0
        %258 = vmatpush.msra.mxu0 0.0
        %259 = vmatpush.msra.mxu0 %v245
        %260 = vmatpush.msra.mxu0 %v232
        %261 = vmatpush.msra.mxu0 %v238
        %262 = vmatpush.msra.mxu0 %v235
        %263 = vmatmul.f32.gmra.mxu0 %v241
        %v264 = vpop.f32.mrf.mxu0
        %v265 = vadd.f32 0.0, %v264
        %266 = vdwg.mxu0
        %v267 = vmax.f32 %v265, 0.0
        %268 = vrot.lane.b32.xlu0 %v267, 4
        %v269 = vpop.permute.xlu0 %268
        %v270 = vmul.f32 %v269, %v228
        %271 = vrot.lane.b32.xlu0 %v267, 2
        %v272 = vpop.permute.xlu0 %271
        %v273 = vmul.f32 %v272, %v231
        %v275 = vsel %vm239, %v223, 0
        %277 = vmatpush.msra.mxu0 0.0
        %278 = vmatpush.msra.mxu0 0.0
        %279 = vmatpush.msra.mxu0 0.0
        %280 = vmatpush.msra.mxu0 0.0
        %281 = vmatpush.msra.mxu0 0.0
        %282 = vmatpush.msra.mxu0 0.0
        %283 = vmatpush.msra.mxu0 0.0
        %284 = vmatpush.msra.mxu0 0.0
        %285 = vmatpush.msra.mxu0 0.0
        %286 = vmatpush.msra.mxu0 0.0
        %287 = vmatpush.msra.mxu0 0.0
        %288 = vmatpush.msra.mxu0 0.0
        %289 = vmatpush.msra.mxu0 %v245
        %290 = vmatpush.msra.mxu0 %v267
        %291 = vmatpush.msra.mxu0 %v273
        %292 = vmatpush.msra.mxu0 %v270
        %293 = vmatmul.f32.gmra.mxu0 %v275
        %v294 = vpop.f32.mrf.mxu0
        %v295 = vadd.f32 0.0, %v294
        %296 = vdwg.mxu0
        %v297 = vmax.f32 %v295, 0.0
        %v298 = vadd.f32 %v297, %v232
        %v299 = vmax.f32 %v298, 0.0
        %vm300 = vcmask 261120
        %301 = vst.msk [vmem:[%s219] sm:$0xff] %vm300, %v299
        %s302 = scalar_lea.vmem %s186, 8 [#allocation2]
        %v303 = vld [vmem:[%s302] sm:$0xff]
        %304 = vrot.lane.b32.xlu0 %v303, 4
        %v305 = vpop.permute.xlu0 %304
        %v306 = vmul.f32 %v305, %v228
        %307 = vrot.lane.b32.xlu0 %v303, 2
        %v308 = vpop.permute.xlu0 %307
        %v309 = vmul.f32 %v308, %v231
        %310 = vmatpush.msra.mxu0 0.0
        %311 = vmatpush.msra.mxu0 0.0
        %312 = vmatpush.msra.mxu0 0.0
        %313 = vmatpush.msra.mxu0 0.0
        %314 = vmatpush.msra.mxu0 0.0
        %315 = vmatpush.msra.mxu0 0.0
        %316 = vmatpush.msra.mxu0 0.0
        %317 = vmatpush.msra.mxu0 0.0
        %318 = vmatpush.msra.mxu0 0.0
        %319 = vmatpush.msra.mxu0 0.0
        %320 = vmatpush.msra.mxu0 0.0
        %321 = vmatpush.msra.mxu0 0.0
        %322 = vmatpush.msra.mxu0 %v245
        %323 = vmatpush.msra.mxu0 %v303
        %324 = vmatpush.msra.mxu0 %v309
        %325 = vmatpush.msra.mxu0 %v306
        %326 = vmatmul.f32.gmra.mxu0 %v241
        %v327 = vpop.f32.mrf.mxu0
        %v328 = vadd.f32 0.0, %v327
        %329 = vdwg.mxu0
        %v330 = vmax.f32 %v328, 0.0
        %331 = vrot.lane.b32.xlu0 %v330, 4
        %v332 = vpop.permute.xlu0 %331
        %v333 = vmul.f32 %v332, %v228
        %334 = vrot.lane.b32.xlu0 %v330, 2
        %v335 = vpop.permute.xlu0 %334
        %v336 = vmul.f32 %v335, %v231
        %337 = vmatpush.msra.mxu0 0.0
        %338 = vmatpush.msra.mxu0 0.0
        %339 = vmatpush.msra.mxu0 0.0
        %340 = vmatpush.msra.mxu0 0.0
        %341 = vmatpush.msra.mxu0 0.0
        %342 = vmatpush.msra.mxu0 0.0
        %343 = vmatpush.msra.mxu0 0.0
        %344 = vmatpush.msra.mxu0 0.0
        %345 = vmatpush.msra.mxu0 0.0
        %346 = vmatpush.msra.mxu0 0.0
        %347 = vmatpush.msra.mxu0 0.0
        %348 = vmatpush.msra.mxu0 0.0
        %349 = vmatpush.msra.mxu0 %v245
        %350 = vmatpush.msra.mxu0 %v330
        %351 = vmatpush.msra.mxu0 %v336
        %352 = vmatpush.msra.mxu0 %v333
        %353 = vmatmul.f32.gmra.mxu0 %v275
        %v354 = vpop.f32.mrf.mxu0
        %v355 = vadd.f32 0.0, %v354
        %356 = vdwg.mxu0
        %v357 = vmax.f32 %v355, 0.0
        %v358 = vadd.f32 %v357, %v303
        %v359 = vmax.f32 %v358, 0.0
        %s360 = scalar_lea.vmem %s219, 8 [#allocation8]
        %361 = vst.msk [vmem:[%s360] sm:$0xff] %vm300, %v359
        %s362 = scalar_lea.vmem %s186, 16 [#allocation2]
        %v363 = vld [vmem:[%s362] sm:$0xff]
        %364 = vrot.lane.b32.xlu0 %v363, 4
        %v365 = vpop.permute.xlu0 %364
        %v366 = vmul.f32 %v365, %v228
        %367 = vrot.lane.b32.xlu0 %v363, 2
        %v368 = vpop.permute.xlu0 %367
        %v369 = vmul.f32 %v368, %v231
        %370 = vmatpush.msra.mxu0 0.0
        %371 = vmatpush.msra.mxu0 0.0
        %372 = vmatpush.msra.mxu0 0.0
        %373 = vmatpush.msra.mxu0 0.0
        %374 = vmatpush.msra.mxu0 0.0
        %375 = vmatpush.msra.mxu0 0.0
        %376 = vmatpush.msra.mxu0 0.0
        %377 = vmatpush.msra.mxu0 0.0
        %378 = vmatpush.msra.mxu0 0.0
        %379 = vmatpush.msra.mxu0 0.0
        %380 = vmatpush.msra.mxu0 0.0
        %381 = vmatpush.msra.mxu0 0.0
        %382 = vmatpush.msra.mxu0 %v245
        %383 = vmatpush.msra.mxu0 %v363
        %384 = vmatpush.msra.mxu0 %v369
        %385 = vmatpush.msra.mxu0 %v366
        %386 = vmatmul.f32.gmra.mxu0 %v241
        %v387 = vpop.f32.mrf.mxu0
        %v388 = vadd.f32 0.0, %v387
        %389 = vdwg.mxu0
        %v390 = vmax.f32 %v388, 0.0
        %391 = vrot.lane.b32.xlu0 %v390, 4
        %v392 = vpop.permute.xlu0 %391
        %v393 = vmul.f32 %v392, %v228
        %394 = vrot.lane.b32.xlu0 %v390, 2
        %v395 = vpop.permute.xlu0 %394
        %v396 = vmul.f32 %v395, %v231
        %397 = vmatpush.msra.mxu0 0.0
        %398 = vmatpush.msra.mxu0 0.0
        %399 = vmatpush.msra.mxu0 0.0
        %400 = vmatpush.msra.mxu0 0.0
        %401 = vmatpush.msra.mxu0 0.0
        %402 = vmatpush.msra.mxu0 0.0
        %403 = vmatpush.msra.mxu0 0.0
        %404 = vmatpush.msra.mxu0 0.0
        %405 = vmatpush.msra.mxu0 0.0
        %406 = vmatpush.msra.mxu0 0.0
        %407 = vmatpush.msra.mxu0 0.0
        %408 = vmatpush.msra.mxu0 0.0
        %409 = vmatpush.msra.mxu0 %v245
        %410 = vmatpush.msra.mxu0 %v390
        %411 = vmatpush.msra.mxu0 %v396
        %412 = vmatpush.msra.mxu0 %v393
        %413 = vmatmul.f32.gmra.mxu0 %v275
        %v414 = vpop.f32.mrf.mxu0
        %v415 = vadd.f32 0.0, %v414
        %416 = vdwg.mxu0
        %v417 = vmax.f32 %v415, 0.0
        %v418 = vadd.f32 %v417, %v363
        %v419 = vmax.f32 %v418, 0.0
        %s420 = scalar_lea.vmem %s219, 16 [#allocation8]
        %421 = vst.msk [vmem:[%s420] sm:$0xff] %vm300, %v419
        %s422 = scalar_lea.vmem %s186, 24 [#allocation2]
        %v423 = vld [vmem:[%s422] sm:$0xff]
        %424 = vrot.lane.b32.xlu0 %v423, 4
        %v425 = vpop.permute.xlu0 %424
        %v426 = vmul.f32 %v425, %v228
        %427 = vrot.lane.b32.xlu0 %v423, 2
        %v428 = vpop.permute.xlu0 %427
        %v429 = vmul.f32 %v428, %v231
        %430 = vmatpush.msra.mxu0 0.0
        %431 = vmatpush.msra.mxu0 0.0
        %432 = vmatpush.msra.mxu0 0.0
        %433 = vmatpush.msra.mxu0 0.0
        %434 = vmatpush.msra.mxu0 0.0
        %435 = vmatpush.msra.mxu0 0.0
        %436 = vmatpush.msra.mxu0 0.0
        %437 = vmatpush.msra.mxu0 0.0
        %438 = vmatpush.msra.mxu0 0.0
        %439 = vmatpush.msra.mxu0 0.0
        %440 = vmatpush.msra.mxu0 0.0
        %441 = vmatpush.msra.mxu0 0.0
        %442 = vmatpush.msra.mxu0 %v245
        %443 = vmatpush.msra.mxu0 %v423
        %444 = vmatpush.msra.mxu0 %v429
        %445 = vmatpush.msra.mxu0 %v426
        %446 = vmatmul.f32.gmra.mxu0 %v241
        %v447 = vpop.f32.mrf.mxu0
        %v448 = vadd.f32 0.0, %v447
        %449 = vdwg.mxu0
        %v450 = vmax.f32 %v448, 0.0
        %451 = vrot.lane.b32.xlu0 %v450, 4
        %v452 = vpop.permute.xlu0 %451
        %v453 = vmul.f32 %v452, %v228
        %454 = vrot.lane.b32.xlu0 %v450, 2
        %v455 = vpop.permute.xlu0 %454
        %v456 = vmul.f32 %v455, %v231
        %457 = vmatpush.msra.mxu0 0.0
        %458 = vmatpush.msra.mxu0 0.0
        %459 = vmatpush.msra.mxu0 0.0
        %460 = vmatpush.msra.mxu0 0.0
        %461 = vmatpush.msra.mxu0 0.0
        %462 = vmatpush.msra.mxu0 0.0
        %463 = vmatpush.msra.mxu0 0.0
        %464 = vmatpush.msra.mxu0 0.0
        %465 = vmatpush.msra.mxu0 0.0
        %466 = vmatpush.msra.mxu0 0.0
        %467 = vmatpush.msra.mxu0 0.0
        %468 = vmatpush.msra.mxu0 0.0
        %469 = vmatpush.msra.mxu0 %v245
        %470 = vmatpush.msra.mxu0 %v450
        %471 = vmatpush.msra.mxu0 %v456
        %472 = vmatpush.msra.mxu0 %v453
        %473 = vmatmul.f32.gmra.mxu0 %v275
        %v474 = vpop.f32.mrf.mxu0
        %v475 = vadd.f32 0.0, %v474
        %476 = vdwg.mxu0
        %v477 = vmax.f32 %v475, 0.0
        %v478 = vadd.f32 %v477, %v423
        %v479 = vmax.f32 %v478, 0.0
        %s480 = scalar_lea.vmem %s219, 24 [#allocation8]
        %481 = vst.msk [vmem:[%s480] sm:$0xff] %vm300, %v479
        %s482 = sand.u32 %s97, 1
        %s483 = scalar_lea.sflag [#allocation4], %s482
        %s484 = sand.u32 %s97, 1
        %s485 = smul.addr %s484, 32
        %s486 = scalar_lea.vmem [#allocation8], %s485
        // Predicated region
        $region45: #{tpu_custom_call.1} parent=31 // pred_check
          %p487 = pneg %p107
        $region46: #{tpu_custom_call.1} parent=31 // pred_check_branch
          %489 = sbr.rel (%p487) target = $region48
        $region47: #{tpu_custom_call.1} parent=31 // pred_region
          %s490 = smul.u32 4, %s21
          %492 = vsyncadd %s483, 0
          %s493 = smul.addr %s490, 8
          %s494 = scalar_lea.hbm %s3, %s493
          %s495 = sshll.u32 %s486, 4
          %s496 = int_to_ptr.vmem [resolvable:$true] %s495
          %s497 = sshll.u32 %s494, 4
          %s498 = int_to_ptr.hbm [resolvable:$true] %s497
          %503 = dma.vmem_to_hbm [thread:$0]  %s496, 512, %s498, %s483, 128, 128, 8
        $region48: #{tpu_custom_call.1} parent=31 // pred_fallthru
          _
      $region32: #{tpu_custom_call.1} parent=5 // pred_fallthru
        _
      %p504 = scmp.le.s32.totalorder 2, %s16
      // Predicated region
      $region49: #{tpu_custom_call.1} parent=5 // pred_check
        %p505 = pneg %p504
      $region50: #{tpu_custom_call.1} parent=5 // pred_check_branch
        %507 = sbr.rel (%p505) target = $region52
      $region51: #{tpu_custom_call.1} parent=5 // pred_region
        %s508 = ssub.s32 %s16, 2
        // Predicated region
        $region53: #{tpu_custom_call.1} parent=51 // pred_check
          %p509 = pneg %p113
        $region54: #{tpu_custom_call.1} parent=51 // pred_check_branch
          %511 = sbr.rel (%p509) target = $region56
        $region55: #{tpu_custom_call.1} parent=51 // pred_region
          %s512 = sand.u32 %s98, 1
          %s513 = scalar_lea.sflag [#allocation4], %s512
          %s514 = sand.u32 %s98, 1
          %s515 = smul.addr %s514, 32
          %s516 = scalar_lea.vmem [#allocation8], %s515
          %518 = dma.done %s513, 512
        $region56: #{tpu_custom_call.1} parent=51 // pred_fallthru
          _
      $region52: #{tpu_custom_call.1} parent=5 // pred_fallthru
        _
    $region6: #{tpu_custom_call.1} parent=1 // loop_footer
      %s20 = sadd.s32 1, %s16
    $region7: #{tpu_custom_call.1} parent=1 // loop_footer_branch
      %15 = sbr.rel target = $region3
    $region8: #{tpu_custom_call.1} parent=1 // loop_exit
      _
    %519 = vsyncpa [#allocation3], 1
    %s520 = scalar_lea.sflag [#allocation3], 1
    %521 = vsyncpa %s520, 1
    %522 = vsyncpa [#allocation6], 1
    %523 = vsyncpa [#allocation4], 1
    %s524 = scalar_lea.sflag [#allocation4], 1
    %525 = vsyncpa %s524, 1

</llo_original>
